<compile_context>
chip_gen: v7x
topology: tpu7x:2x2x1
jax: 0.10.0
libtpu: 0.0.40
codegen_flags: <defaults>
</compile_context>

<pallas_src>
import functools
import math

import jax
import jax.numpy as jnp
from jax import lax
from jax.experimental import pallas as pl
from jax.experimental.pallas import tpu as pltpu

_LANES = 128
_ACC_ROWS = 64          # max accumulator rows (breaks serial vadd dependency chain)
_MAX_STRIPS = 16        # cap on the unrolled in-kernel strip loop


def _round_up(x: int, m: int) -> int:
    return (x + m - 1) // m * m


def _tensorcores_per_chip() -> int:
    """2 on dual-TensorCore / megacore parts (v4, v5p, v7x); 1 elsewhere."""
    try:
        dev = jax.devices()[0]
        if dev.platform != "tpu":
            return 1
        kind = str(getattr(dev, "device_kind", "")).lower()
    except Exception:
        return 1
    if "lite" in kind or "v5e" in kind or "v6e" in kind or "v6" in kind:
        return 1
    if any(tag in kind for tag in ("v4", "v5p", "v5 p", "v5", "v7", "7x", "tpu7")):
        return 2
    return 1


def _rec_loss_kernel(xh_ref, x_ref, o_ref, acc_ref, *, use_l1: bool,
                     tile_rows: int, strip_rows: int, acc_rows: int,
                     valid_rows: int, cols: int):
    c = pl.program_id(0)              # parallel slice (one per TensorCore on v7x)
    i = pl.program_id(1)              # reduction step within the slice
    n_steps = pl.num_programs(1)
    n_strips = tile_rows // strip_rows

    @pl.when(i == 0)
    def _():
        acc_ref[...] = jnp.zeros_like(acc_ref)

    block = c * n_steps + i           # logical (unclamped) block id
    block_end = (block + 1) * tile_rows

    def strip_v(s):
        r0 = pl.multiple_of(s * strip_rows, strip_rows)
        d = (xh_ref[pl.ds(r0, strip_rows), :].astype(jnp.float32)
             - x_ref[pl.ds(r0, strip_rows), :].astype(jnp.float32))
        return jnp.abs(d) if use_l1 else d * d

    def fold(v):
        # (strip_rows, cols) -> (acc_rows, cols): pure VPU adds, wide ILP.
        return v.reshape(-1, acc_rows, cols).sum(axis=0)

    def run_strips(strip_body):
        if n_strips == 1:
            strip_body(0, 0)
        else:
            lax.fori_loop(0, n_strips, strip_body, 0, unroll=True)

    # Fast path: every row of this block is real data -> no iota/compare/select.
    @pl.when(block_end <= valid_rows)
    def _():
        def body(s, carry):
            acc_ref[...] += fold(strip_v(s))
            return carry
        run_strips(body)

    # Boundary path: ragged last block of the slice, or the clamped duplicate
    # block when the block count does not split evenly across slices.
    @pl.when(block_end > valid_rows)
    def _():
        base = block * tile_rows
        def body(s, carry):
            v = strip_v(s)
            row = (base + s * strip_rows
                   + lax.broadcasted_iota(jnp.int32, (strip_rows, 1), 0))
            acc_ref[...] += fold(jnp.where(row < valid_rows, v, 0.0))
            return carry
        run_strips(body)

    @pl.when(i == n_steps - 1)
    def _():
        o_ref[...] = acc_ref[...]


def reconstruction_loss(x_hat, x, rec_loss_type: str = "L1", *,
                        block_bytes: int = 4 << 20):
    """Mean L1 / L2 loss over all elements (matches nn.L1Loss / nn.MSELoss)."""
    lt = rec_loss_type.lower()
    if lt == "l1":
        use_l1 = True
    elif lt == "l2":
        use_l1 = False
    else:
        raise ValueError(f"Unknown reconstruction loss type '{rec_loss_type}'!")

    if x_hat.shape != x.shape:
        raise ValueError(f"shape mismatch: {x_hat.shape} vs {x.shape}")
    n_elems = int(math.prod(x_hat.shape)) if x_hat.shape else 1
    if n_elems == 0:
        return jnp.full((), jnp.nan, dtype=jnp.float32)

    # Keep each input in its native (<= 32-bit, floating) dtype in HBM; the
    # f32 cast happens per-strip inside the kernel, hidden under the DMA.
    def _native(a):
        if jnp.issubdtype(a.dtype, jnp.floating) and jnp.dtype(a.dtype).itemsize <= 4:
            return a
        return a.astype(jnp.float32)

    xh = _native(x_hat)
    xx = _native(x)

    # Free 2-D view: lane-dense (rows, 128) when possible, otherwise the
    # largest divisor of n_elems <= 1024 as the column count (still copy-free).
    if n_elems % _LANES == 0:
        cols = _LANES
    else:
        cols = 1
        for d in range(min(1024, n_elems), 0, -1):
            if n_elems % d == 0:
                cols = d
                break
    rows = n_elems // cols
    xh2 = xh.reshape(rows, cols)
    xx2 = xx.reshape(rows, cols)

    it_h = jnp.dtype(xh.dtype).itemsize
    it_x = jnp.dtype(xx.dtype).itemsize
    max_item = max(it_h, it_x)

    # Tile / strip / accumulator sizing (all multiples chain cleanly):
    #   acc_rows | strip_rows | tile_rows,  tile_rows % 8 == 0.
    acc_rows = min(_ACC_ROWS, _round_up(rows, 8))
    raw_tile = max(acc_rows,
                   (block_bytes // (cols * max_item)) // acc_rows * acc_rows)
    raw_tile = min(raw_tile, _round_up(rows, acc_rows))
    strip_rows = min(_round_up(512, acc_rows), raw_tile)
    while raw_tile // strip_rows > _MAX_STRIPS:
        strip_rows *= 2
    tile_rows = max(strip_rows, raw_tile // strip_rows * strip_rows)
    num_blocks = pl.cdiv(rows, tile_rows)

    # Two "parallel" slices only where the chip really has two TensorCores.
    num_slices = 2 if (num_blocks >= 2 and _tensorcores_per_chip() >= 2) else 1
    steps = pl.cdiv(num_blocks, num_slices)

    def in_map(c, i):
        return (jnp.minimum(c * steps + i, num_blocks - 1), 0)  # never fully OOB

    kernel = functools.partial(
        _rec_loss_kernel, use_l1=use_l1, tile_rows=tile_rows,
        strip_rows=strip_rows, acc_rows=acc_rows, valid_rows=rows, cols=cols)

    out_rows = num_slices * acc_rows
    cost = pl.CostEstimate(
        flops=3 * n_elems,
        transcendentals=0,
        bytes_accessed=n_elems * (it_h + it_x) + out_rows * cols * 4)

    partials = pl.pallas_call(
        kernel,
        out_shape=jax.ShapeDtypeStruct((out_rows, cols), jnp.float32),
        grid_spec=pltpu.PrefetchScalarGridSpec(
            num_scalar_prefetch=0,
            grid=(num_slices, steps),
            in_specs=[
                pl.BlockSpec((tile_rows, cols), in_map),
                pl.BlockSpec((tile_rows, cols), in_map),
            ],
            out_specs=pl.BlockSpec((acc_rows, cols), lambda c, i: (c, 0)),
            scratch_shapes=[pltpu.VMEM((acc_rows, cols), jnp.float32)],
        ),
        compiler_params=pltpu.CompilerParams(
            dimension_semantics=("parallel", "arbitrary"),
            vmem_limit_bytes=32 * 1024 * 1024,
        ),
        cost_estimate=cost,
    )(xh2, xx2)

    # Tiny final reduction (<= 128 x 1024 f32) + mean scale, once, in XLA.
    return jnp.sum(partials) / jnp.float32(n_elems)


if __name__ == "__main__":
    key = jax.random.PRNGKey(0)
    k1, k2 = jax.random.split(key)
    # Small NCHW shapes consistent with an image-reconstruction setting.
    x_hat = jax.random.normal(k1, (2, 4, 16, 16), dtype=jnp.float32)
    x = jax.random.normal(k2, (2, 4, 16, 16), dtype=jnp.float32)

    l1 = jax.block_until_ready(reconstruction_loss(x_hat, x, "L1"))
    l2 = jax.block_until_ready(reconstruction_loss(x_hat, x, "L2"))
    ref_l1 = jnp.mean(jnp.abs(x_hat - x))
    ref_l2 = jnp.mean((x_hat - x) ** 2)
    assert jnp.allclose(l1, ref_l1, rtol=1e-5, atol=1e-6), (l1, ref_l1)
    assert jnp.allclose(l2, ref_l2, rtol=1e-5, atol=1e-6), (l2, ref_l2)

    def _ref(a, b, kind):
        d = a.astype(jnp.float32) - b.astype(jnp.float32)
        return jnp.mean(jnp.abs(d)) if kind == "L1" else jnp.mean(d * d)

    # Extra coverage: ragged (non-128-multiple) element count, mixed precision
    # (native bf16 stays bf16 in HBM), multi-block grid with a ragged last
    # block (masked boundary path), and the multi-strip unrolled path.
    cases = [
        ((2, 3, 5, 7),    jnp.float32, jnp.float32,  "L1", 4 << 20),
        ((2, 4, 16, 16),  jnp.float32, jnp.bfloat16, "L2", 4 << 20),
        ((2, 5, 24, 128), jnp.float32, jnp.float32,  "L1", 32 * 1024),
        ((2, 8, 64, 128), jnp.float32, jnp.float32,  "L2", 4 << 20),
    ]
    for shape, da, db, kind, bb in cases:
        ka, kb = jax.random.split(jax.random.PRNGKey(sum(shape)))
        a = jax.random.normal(ka, shape, dtype=jnp.float32).astype(da)
        b = jax.random.normal(kb, shape, dtype=jnp.float32).astype(db)
        got = jax.block_until_ready(
            reconstruction_loss(a, b, kind, block_bytes=bb))
        want = _ref(a, b, kind)
        assert jnp.allclose(got, want, rtol=1e-5, atol=1e-6), (
            shape, da, db, kind, got, want)

    print("KERNEL_OK")
</pallas_src>

<mosaic_0001>
module attributes {stable_mosaic.version = 11 : i64} {
  func.func @_rec_loss_kernel(%arg0: i32, %arg1: i32, %arg2: memref<16x128xf32, #tpu.memory_space<vmem>>, %arg3: memref<16x128xf32, #tpu.memory_space<vmem>>, %arg4: memref<16x128xf32, #tpu.memory_space<vmem>>, %arg5: memref<16x128xf32, #tpu.memory_space<vmem>>) attributes {dimension_semantics = [#tpu.dimension_semantics<parallel>, #tpu.dimension_semantics<arbitrary>], iteration_bounds = array<i64: 1, 1>, scalar_prefetch = 0 : i64, scratch_operands = 1 : i64, tpu.core_type = #tpu.core_type<tc>, window_params = [{transform_indices = @transform_0, window_bounds = array<i64: 16, 128>}, {transform_indices = @transform_1, window_bounds = array<i64: 16, 128>}, {transform_indices = @transform_2, window_bounds = array<i64: 16, 128>}]} {
    %c0_i32 = arith.constant 0 : i32
    %0 = arith.cmpi eq, %arg1, %c0_i32 : i32
    %1 = arith.extui %0 : i1 to i32
    %c0_i32_0 = arith.constant 0 : i32
    %2 = arith.cmpi ne, %1, %c0_i32_0 : i32
    scf.if %2 {
      %cst = arith.constant 0.000000e+00 : f32
      %16 = vector.broadcast %cst : f32 to vector<16x128xf32>
      %c0 = arith.constant 0 : index
      %c0_8 = arith.constant 0 : index
      %17 = vector.load %arg5[%c0, %c0_8] : memref<16x128xf32, #tpu.memory_space<vmem>>, vector<16x128xf32>
      tpu.vector_store %arg5[%c0, %c0_8], %16 {strides = array<i32>} : memref<16x128xf32, #tpu.memory_space<vmem>>, vector<16x128xf32>,
    } else {
    }
    %c1_i32 = arith.constant 1 : i32
    %3 = arith.muli %arg0, %c1_i32 : i32
    %4 = arith.addi %3, %arg1 : i32
    %c1_i32_1 = arith.constant 1 : i32
    %5 = arith.addi %4, %c1_i32_1 : i32
    %c16_i32 = arith.constant 16 : i32
    %6 = arith.muli %5, %c16_i32 : i32
    %c16_i32_2 = arith.constant 16 : i32
    %7 = arith.cmpi sle, %6, %c16_i32_2 : i32
    %8 = arith.extui %7 : i1 to i32
    %c0_i32_3 = arith.constant 0 : i32
    %9 = arith.cmpi ne, %8, %c0_i32_3 : i32
    scf.if %9 {
      %c0 = arith.constant 0 : index
      %c0_8 = arith.constant 0 : index
      %16 = vector.load %arg5[%c0, %c0_8] : memref<16x128xf32, #tpu.memory_space<vmem>>, vector<16x128xf32>
      %c0_i32_9 = arith.constant 0 : i32
      %17 = tpu.assume_multiple %c0_i32_9, 16 : i32
      %18 = arith.index_cast %17 : i32 to index
      %c0_10 = arith.constant 0 : index
      %19 = vector.load %arg2[%18, %c0_10] : memref<16x128xf32, #tpu.memory_space<vmem>>, vector<16x128xf32>
      %20 = arith.index_cast %17 : i32 to index
      %c0_11 = arith.constant 0 : index
      %21 = vector.load %arg3[%20, %c0_11] : memref<16x128xf32, #tpu.memory_space<vmem>>, vector<16x128xf32>
      %22 = arith.subf %19, %21 : vector<16x128xf32>
      %23 = math.absf %22 : vector<16x128xf32>
      %24 = vector.shape_cast %23 : vector<16x128xf32> to vector<1x16x128xf32>
      %cst = arith.constant dense<0.000000e+00> : vector<16x128xf32>
      %25 = vector.multi_reduction <add>, %24, %cst [0] : vector<1x16x128xf32> to vector<16x128xf32>
      %26 = arith.addf %16, %25 : vector<16x128xf32>
      %c0_12 = arith.constant 0 : index
      %c0_13 = arith.constant 0 : index
      %27 = vector.load %arg5[%c0_12, %c0_13] : memref<16x128xf32, #tpu.memory_space<vmem>>, vector<16x128xf32>
      tpu.vector_store %arg5[%c0_12, %c0_13], %26 {strides = array<i32>} : memref<16x128xf32, #tpu.memory_space<vmem>>, vector<16x128xf32>,
    } else {
    }
    %c16_i32_4 = arith.constant 16 : i32
    %10 = arith.cmpi sgt, %6, %c16_i32_4 : i32
    %11 = arith.extui %10 : i1 to i32
    %c0_i32_5 = arith.constant 0 : i32
    %12 = arith.cmpi ne, %11, %c0_i32_5 : i32
    scf.if %12 {
      %c16_i32_8 = arith.constant 16 : i32
      %16 = arith.muli %4, %c16_i32_8 : i32
      %c0_i32_9 = arith.constant 0 : i32
      %17 = tpu.assume_multiple %c0_i32_9, 16 : i32
      %18 = arith.index_cast %17 : i32 to index
      %c0 = arith.constant 0 : index
      %19 = vector.load %arg2[%18, %c0] : memref<16x128xf32, #tpu.memory_space<vmem>>, vector<16x128xf32>
      %20 = arith.index_cast %17 : i32 to index
      %c0_10 = arith.constant 0 : index
      %21 = vector.load %arg3[%20, %c0_10] : memref<16x128xf32, #tpu.memory_space<vmem>>, vector<16x128xf32>
      %22 = arith.subf %19, %21 : vector<16x128xf32>
      %23 = math.absf %22 : vector<16x128xf32>
      %c0_i32_11 = arith.constant 0 : i32
      %24 = arith.addi %16, %c0_i32_11 : i32
      %25 = tpu.iota {dimensions = array<i32: 0>} : vector<16x1xi32>
      %26 = vector.broadcast %24 : i32 to vector<16x1xi32>
      %27 = arith.addi %26, %25 : vector<16x1xi32>
      %c0_12 = arith.constant 0 : index
      %c0_13 = arith.constant 0 : index
      %28 = vector.load %arg5[%c0_12, %c0_13] : memref<16x128xf32, #tpu.memory_space<vmem>>, vector<16x128xf32>
      %c16_i32_14 = arith.constant 16 : i32
      %29 = vector.broadcast %c16_i32_14 : i32 to vector<16x1xi32>
      %30 = arith.cmpi slt, %27, %29 : vector<16x1xi32>
      %cst = arith.constant 0.000000e+00 : f32
      %31 = vector.shape_cast %30 : vector<16x1xi1> to vector<16x1xi1>
      %32 = vector.broadcast %31 : vector<16x1xi1> to vector<16x128xi1>
      %33 = vector.broadcast %cst : f32 to vector<16x128xf32>
      %34 = arith.select %32, %23, %33 : vector<16x128xi1>, vector<16x128xf32>
      %35 = vector.shape_cast %34 : vector<16x128xf32> to vector<1x16x128xf32>
      %cst_15 = arith.constant dense<0.000000e+00> : vector<16x128xf32>
      %36 = vector.multi_reduction <add>, %35, %cst_15 [0] : vector<1x16x128xf32> to vector<16x128xf32>
      %37 = arith.addf %28, %36 : vector<16x128xf32>
      %c0_16 = arith.constant 0 : index
      %c0_17 = arith.constant 0 : index
      %38 = vector.load %arg5[%c0_16, %c0_17] : memref<16x128xf32, #tpu.memory_space<vmem>>, vector<16x128xf32>
      tpu.vector_store %arg5[%c0_16, %c0_17], %37 {strides = array<i32>} : memref<16x128xf32, #tpu.memory_space<vmem>>, vector<16x128xf32>,
    } else {
    }
    %c0_i32_6 = arith.constant 0 : i32
    %13 = arith.cmpi eq, %arg1, %c0_i32_6 : i32
    %14 = arith.extui %13 : i1 to i32
    %c0_i32_7 = arith.constant 0 : i32
    %15 = arith.cmpi ne, %14, %c0_i32_7 : i32
    scf.if %15 {
      %c0 = arith.constant 0 : index
      %c0_8 = arith.constant 0 : index
      %16 = vector.load %arg5[%c0, %c0_8] : memref<16x128xf32, #tpu.memory_space<vmem>>, vector<16x128xf32>
      %c0_9 = arith.constant 0 : index
      %c0_10 = arith.constant 0 : index
      %17 = vector.load %arg4[%c0_9, %c0_10] : memref<16x128xf32, #tpu.memory_space<vmem>>, vector<16x128xf32>
      tpu.vector_store %arg4[%c0_9, %c0_10], %16 {strides = array<i32>} : memref<16x128xf32, #tpu.memory_space<vmem>>, vector<16x128xf32>,
    } else {
    }
    return
  }
  func.func @transform_0(%arg0: i32, %arg1: i32) -> (i32, i32) {
    %c1_i32 = arith.constant 1 : i32
    %0 = arith.muli %arg0, %c1_i32 : i32
    %1 = arith.addi %0, %arg1 : i32
    %c0_i32 = arith.constant 0 : i32
    %2 = arith.minsi %1, %c0_i32 : i32
    %c0_i32_0 = arith.constant 0 : i32
    %c0_i32_1 = arith.constant 0 : i32
    return %2, %c0_i32_0 : i32, i32
  }
  func.func @transform_1(%arg0: i32, %arg1: i32) -> (i32, i32) {
    %c1_i32 = arith.constant 1 : i32
    %0 = arith.muli %arg0, %c1_i32 : i32
    %1 = arith.addi %0, %arg1 : i32
    %c0_i32 = arith.constant 0 : i32
    %2 = arith.minsi %1, %c0_i32 : i32
    %c0_i32_0 = arith.constant 0 : i32
    %c0_i32_1 = arith.constant 0 : i32
    return %2, %c0_i32_0 : i32, i32
  }
  func.func @transform_2(%arg0: i32, %arg1: i32) -> (i32, i32) {
    %c0_i32 = arith.constant 0 : i32
    %c0_i32_0 = arith.constant 0 : i32
    return %arg0, %c0_i32 : i32, i32
  }
}

</mosaic_0001>

<llo_original>
// kernel: tpu_custom_call.1
$region0: #{tpu_custom_call.1}
  #allocation0 [shape = 'u32[]', space=smem, size = 0x4, offset = 0x4, fixed_abs, tag = 'smem constant byte address 0x4 - core index']
  #allocation1 [shape = 'u32[144,128]{1,0:T(1,128)}', space=vmem, size = 0x12000, scoped, tag = 'internal scratch']
  #allocation2 [shape = 'f32[16,128]{1,0:T(8,128)}', space=vmem, size = 0x2000, scoped, tag = 'scratch operand']
  %s0 = inlined_call_operand.hbm [shape: f32[16,128], index: 0, kind: input, shape index: {}]
  %s1 = inlined_call_operand.hbm [shape: f32[16,128], index: 1, kind: input, shape index: {}]
  %s2 = inlined_call_operand.hbm [shape: f32[16,128], index: 2, kind: output, shape index: {}]
  %s3 = sld [smem:[#allocation0]]
  $region42: #{tpu_custom_call.1} parent=0
    _
  %s5 = ssub.s32 1, %s3
  %s6 = scalar_select 0, %s5, %s3
  $region1: #{tpu_custom_call.1} parent=0
    #allocation3 [shape = 'u8[8192]{0}', space=vmem, size = 0x2000, scoped, tag = 'input window, operand 0, single buffered']
    #allocation4 [shape = 's32[1]{0}', space=sflag, size = 0x4, scoped, tag = 'scoped memory for tpu_custom_call.1']
    #allocation5 [shape = 's32[1]{0}', space=sflag, size = 0x4, scoped, tag = 'scoped memory for tpu_custom_call.1']
    #allocation6 [shape = 'u8[8192]{0}', space=vmem, size = 0x2000, scoped, tag = 'input window, operand 1, single buffered']
    #allocation7 [shape = 's32[1]{0}', space=sflag, size = 0x4, scoped, tag = 'scoped memory for tpu_custom_call.1']
    #allocation8 [shape = 'u8[8192]{0}', space=vmem, size = 0x2000, scoped, tag = 'output window, operand 0, single buffered']
    %7 = vsyncpa [#allocation4], 0
    %8 = vsyncpa [#allocation7], 0
    %9 = vsyncpa [#allocation5], 0
    // Predicated region
    $region2: #{tpu_custom_call.1} parent=1 // pred_check
      _
    $region3: #{tpu_custom_call.1} parent=1 // pred_check_branch
      %11 = sbr.rel (0) target = $region5
    $region4: #{tpu_custom_call.1} parent=1 // pred_region
      %s12 = sadd.s32 0, 0
      %p13 = scmp.lt.s32.totalorder %s12, 0
      %s14 = scalar_select %p13, %s12, 0
      %s15 = smul.u32 2, %s14
      %s17 = ssub.s32 256, 256
      %18 = vsyncadd [#allocation4], %s17
      %s19 = smul.addr %s15, 128
      %s20 = scalar_lea.hbm %s0, %s19
      %s21 = sshll.u32 [#allocation3], 4
      %s22 = int_to_ptr.vmem [resolvable:$true] %s21
      %27 = dma.hbm_to_vmem [thread:$0]  %s20, 256, %s22, [#allocation4], 128, 128, 8
    $region5: #{tpu_custom_call.1} parent=1 // pred_fallthru
      _
    // Predicated region
    $region6: #{tpu_custom_call.1} parent=1 // pred_check
      _
    $region7: #{tpu_custom_call.1} parent=1 // pred_check_branch
      %29 = sbr.rel (0) target = $region9
    $region8: #{tpu_custom_call.1} parent=1 // pred_region
      %s30 = sadd.s32 0, 0
      %p31 = scmp.lt.s32.totalorder %s30, 0
      %s32 = scalar_select %p31, %s30, 0
      %s33 = smul.u32 2, %s32
      %s35 = ssub.s32 256, 256
      %36 = vsyncadd [#allocation7], %s35
      %s37 = smul.addr %s33, 128
      %s38 = scalar_lea.hbm %s1, %s37
      %s39 = sshll.u32 [#allocation6], 4
      %s40 = int_to_ptr.vmem [resolvable:$true] %s39
      %45 = dma.hbm_to_vmem [thread:$0]  %s38, 256, %s40, [#allocation7], 128, 128, 8
    $region9: #{tpu_custom_call.1} parent=1 // pred_fallthru
      _
    // Predicated region
    $region10: #{tpu_custom_call.1} parent=1 // pred_check
      _
    $region11: #{tpu_custom_call.1} parent=1 // pred_check_branch
      %47 = sbr.rel (0) target = $region13
    $region12: #{tpu_custom_call.1} parent=1 // pred_region
      %48 = dma.done [#allocation4], 256
    $region13: #{tpu_custom_call.1} parent=1 // pred_fallthru
      _
    // Predicated region
    $region14: #{tpu_custom_call.1} parent=1 // pred_check
      _
    $region15: #{tpu_custom_call.1} parent=1 // pred_check_branch
      %50 = sbr.rel (0) target = $region17
    $region16: #{tpu_custom_call.1} parent=1 // pred_region
      %51 = dma.done [#allocation7], 256
    $region17: #{tpu_custom_call.1} parent=1 // pred_fallthru
      _
    %s52 = sadd.s32 0, 0
    %p53 = scmp.lt.s32.totalorder %s52, 0
    %s54 = scalar_select %p53, %s52, 0
    %s55 = smul.u32 2, %s54
    %s56 = sadd.s32 0, 0
    %p57 = scmp.lt.s32.totalorder %s56, 0
    %s58 = scalar_select %p57, %s56, 0
    %s59 = smul.u32 2, %s58
    %p60 = scmp.eq.s32.totalorder 0, 0
    // Predicated region
    $region18: #{tpu_custom_call.1} parent=1 // pred_check
      %p61 = pneg %p60
    $region19: #{tpu_custom_call.1} parent=1 // pred_check_branch
      %63 = sbr.rel (%p61) target = $region21
    $region20: #{tpu_custom_call.1} parent=1 // pred_region
      %64 = vst [vmem:[#allocation2] sm:$0xff] 0.0
      %65 = vst [vmem:[#allocation2 + $0x8] sm:$0xff] 0.0
    $region21: #{tpu_custom_call.1} parent=1 // pred_fallthru
      _
    %s66 = sadd.s32 0, 0
    %s67 = sadd.s32 %s66, 1
    %s68 = smul.u32 %s67, 16
    %p69 = scmp.le.s32.totalorder %s68, 16
    // Predicated region
    $region22: #{tpu_custom_call.1} parent=1 // pred_check
      %p70 = pneg %p69
    $region23: #{tpu_custom_call.1} parent=1 // pred_check_branch
      %72 = sbr.rel (%p70) target = $region25
    $region24: #{tpu_custom_call.1} parent=1 // pred_region
      %v73 = vld [vmem:[#allocation2] sm:$0xff]
      %v74 = vld [vmem:[#allocation2 + $0x8] sm:$0xff]
      %v75 = vld [vmem:[#allocation3] sm:$0xff]
      %v76 = vld [vmem:[#allocation3 + $0x8] sm:$0xff]
      %v77 = vld [vmem:[#allocation6] sm:$0xff]
      %v78 = vld [vmem:[#allocation6 + $0x8] sm:$0xff]
      %v79 = vsub.f32 %v75, %v77
      %v80 = vsub.f32 %v76, %v78
      %v81 = vand.u32 2147483647, %v79
      %v82 = vand.u32 2147483647, %v80
      %v83 = vadd.f32 %v81, 0.0
      %v84 = vadd.f32 %v82, 0.0
      %v85 = vadd.f32 %v73, %v83
      %v86 = vadd.f32 %v74, %v84
      %87 = vst [vmem:[#allocation2] sm:$0xff] %v85
      %88 = vst [vmem:[#allocation2 + $0x8] sm:$0xff] %v86
    $region25: #{tpu_custom_call.1} parent=1 // pred_fallthru
      _
    %p89 = scmp.gt.s32.totalorder %s68, 16
    // Predicated region
    $region26: #{tpu_custom_call.1} parent=1 // pred_check
      %p90 = pneg %p89
    $region27: #{tpu_custom_call.1} parent=1 // pred_check_branch
      %92 = sbr.rel (%p90) target = $region29
    $region28: #{tpu_custom_call.1} parent=1 // pred_region
      %s93 = smul.u32 %s66, 16
      %v94 = vld [vmem:[#allocation3] sm:$0xff]
      %v95 = vld [vmem:[#allocation3 + $0x8] sm:$0xff]
      %v96 = vld [vmem:[#allocation6] sm:$0xff]
      %v97 = vld [vmem:[#allocation6 + $0x8] sm:$0xff]
      %v98 = vsub.f32 %v94, %v96
      %v99 = vsub.f32 %v95, %v97
      %v100 = vand.u32 2147483647, %v98
      %v101 = vand.u32 2147483647, %v99
      %v102 = vlaneseq
      %v103 = vshrl.u32 %v102, 7
      %v104 = vadd.s32 %v103, 8
      %v105 = vstv %s93
      %v106 = vadd.s32 %v105, %v103
      %v107 = vadd.s32 %v105, %v104
      %v108 = vld [vmem:[#allocation2] sm:$0xff]
      %v109 = vld [vmem:[#allocation2 + $0x8] sm:$0xff]
      %vm110 = vcmp.lt.s32.totalorder %v106, 16
      %vm111 = vcmp.lt.s32.totalorder %v107, 16
      %v112 = vsel %vm110, 1, 0
      %v113 = vsel %vm111, 1, 0
      %vm114 = vcmp.eq.s32.totalorder %v112, 1
      %vm115 = vcmp.eq.s32.totalorder %v113, 1
      %v116 = vsel %vm114, %v100, 0.0
      %v117 = vsel %vm115, %v101, 0.0
      %v118 = vadd.f32 %v116, 0.0
      %v119 = vadd.f32 %v117, 0.0
      %v120 = vadd.f32 %v108, %v118
      %v121 = vadd.f32 %v109, %v119
      %122 = vst [vmem:[#allocation2] sm:$0xff] %v120
      %123 = vst [vmem:[#allocation2 + $0x8] sm:$0xff] %v121
    $region29: #{tpu_custom_call.1} parent=1 // pred_fallthru
      _
    // Predicated region
    $region30: #{tpu_custom_call.1} parent=1 // pred_check
      %p124 = pneg %p60
    $region31: #{tpu_custom_call.1} parent=1 // pred_check_branch
      %126 = sbr.rel (%p124) target = $region33
    $region32: #{tpu_custom_call.1} parent=1 // pred_region
      %v127 = vld [vmem:[#allocation2] sm:$0xff]
      %v128 = vld [vmem:[#allocation2 + $0x8] sm:$0xff]
      %129 = vst [vmem:[#allocation8] sm:$0xff] %v127
      %130 = vst [vmem:[#allocation8 + $0x8] sm:$0xff] %v128
    $region33: #{tpu_custom_call.1} parent=1 // pred_fallthru
      _
    // Predicated region
    $region34: #{tpu_custom_call.1} parent=1 // pred_check
      _
    $region35: #{tpu_custom_call.1} parent=1 // pred_check_branch
      %132 = sbr.rel (0) target = $region37
    $region36: #{tpu_custom_call.1} parent=1 // pred_region
      %s134 = ssub.s32 256, 256
      %135 = vsyncadd [#allocation5], %s134
      %s136 = sshll.u32 [#allocation8], 4
      %s137 = int_to_ptr.vmem [resolvable:$true] %s136
      %142 = dma.vmem_to_hbm [thread:$0]  %s137, 256, %s2, [#allocation5], 128, 128, 8
    $region37: #{tpu_custom_call.1} parent=1 // pred_fallthru
      _
    // Predicated region
    $region38: #{tpu_custom_call.1} parent=1 // pred_check
      _
    $region39: #{tpu_custom_call.1} parent=1 // pred_check_branch
      %144 = sbr.rel (0) target = $region41
    $region40: #{tpu_custom_call.1} parent=1 // pred_region
      %145 = dma.done [#allocation5], 256
    $region41: #{tpu_custom_call.1} parent=1 // pred_fallthru
      _
    %146 = vsyncpa [#allocation4], 1
    %147 = vsyncpa [#allocation7], 1
    %148 = vsyncpa [#allocation5], 1

</llo_original>
